<compile_context>
chip_gen: v7x
topology: tpu7x:2x2x1
jax: 0.10.0
libtpu: 0.0.40
codegen_flags: <defaults>
</compile_context>

<pallas_src>
import functools
import math

import jax
import jax.numpy as jnp
from jax.experimental import pallas as pl
from jax.experimental.pallas import tpu as pltpu


# ----------------------------- small helpers -----------------------------

def _round_up(x, m):
    return ((x + m - 1) // m) * m


def _cdiv(a, b):
    return (a + b - 1) // b


def _device_kind():
    try:
        return jax.devices()[0].device_kind.lower()
    except Exception:
        return ""


def _vmem_cap_bytes():
    kind = _device_kind()
    if "v7" in kind or "7x" in kind:
        return 56 * 1024 * 1024      # v7x: 64 MiB physical per TC, keep headroom
    return 100 * 1024 * 1024         # v5e / v6e: 128 MiB physical VMEM


def _elementwise_dtype():
    # v6e / v7x have bf16 VALU + EUP -> do bias-add / GELU in bf16 there;
    # v5e (and unknown chips) keep the f32 elementwise path.
    kind = _device_kind()
    if "v6" in kind or "v7" in kind or "7x" in kind:
        return jnp.bfloat16
    return jnp.float32


@functools.lru_cache(maxsize=None)
def _buffered_one_supported():
    """One-time compile-level check that pipeline_mode=pl.Buffered(1) lowers here."""
    if not hasattr(pl, "Buffered"):
        return False
    try:
        def _copy(x_ref, o_ref):
            o_ref[...] = x_ref[...]

        probe = pl.pallas_call(
            _copy,
            out_shape=jax.ShapeDtypeStruct((8, 128), jnp.float32),
            grid_spec=pltpu.PrefetchScalarGridSpec(
                num_scalar_prefetch=0,
                grid=(1,),
                in_specs=[pl.BlockSpec((8, 128), lambda i: (0, 0),
                                       pipeline_mode=pl.Buffered(1))],
                out_specs=pl.BlockSpec((8, 128), lambda i: (0, 0)),
            ),
        )
        jax.block_until_ready(probe(jnp.zeros((8, 128), jnp.float32)))
        return True
    except Exception:
        return False


# ------------------------------- kernels ---------------------------------

def _mlp_resident_kernel(x_ref, w1_ref, b1_ref, w2_ref, b2_ref, o_ref, *, ew_dtype):
    # backbone linear: bf16 MXU, f32 accumulation
    h = jnp.dot(x_ref[...], w1_ref[...], preferred_element_type=jnp.float32)
    # bias + GELU (tanh approximation -> EUP slot); bf16 elementwise on v6e/v7x
    h = h.astype(ew_dtype) + b1_ref[...].astype(ew_dtype)
    h = jax.nn.gelu(h, approximate=True)
    # selected task head: bf16 MXU, f32 accumulation, f32 bias
    o = jnp.dot(h.astype(w2_ref.dtype), w2_ref[...], preferred_element_type=jnp.float32)
    o_ref[...] = (o + b2_ref[...]).astype(o_ref.dtype)


def _mlp_hidstream_kernel(x_ref, w1_ref, b1_ref, w2_ref, b2_ref, o_ref, acc_ref, *,
                          ew_dtype):
    # Streams W1 column-blocks / W2 row-blocks over the hidden dim (grid axis 1,
    # "arbitrary"). Exact because GELU is elementwise over hid and padded hid
    # columns contribute gelu(0) = 0.
    k = pl.program_id(1)

    @pl.when(k == 0)
    def _():
        acc_ref[...] = jnp.zeros_like(acc_ref)

    h = jnp.dot(x_ref[...], w1_ref[...], preferred_element_type=jnp.float32)
    h = h.astype(ew_dtype) + b1_ref[...].astype(ew_dtype)
    h = jax.nn.gelu(h, approximate=True)
    acc_ref[...] += jnp.dot(h.astype(w2_ref.dtype), w2_ref[...],
                            preferred_element_type=jnp.float32)

    @pl.when(k == pl.num_programs(1) - 1)
    def _():
        o_ref[...] = (acc_ref[...] + b2_ref[...]).astype(o_ref.dtype)


# --------------------------- parameter prep (one-time) --------------------------

def prepare_backbone_params(w1, b1):
    """One-time bf16 cast + lane padding of the backbone Linear. Cache and reuse."""
    in_f, hid_f = w1.shape
    hid_pad = _round_up(hid_f, 128)
    w1_p = jnp.pad(w1.astype(jnp.bfloat16), ((0, 0), (0, hid_pad - hid_f)))
    b1_p = jnp.pad(b1.astype(jnp.float32), ((0, hid_pad - hid_f),)).reshape(1, hid_pad)
    return (w1_p, b1_p)


def prepare_head_params(w2, b2, hid_pad):
    """One-time bf16 cast + pad of a task head to [hid_pad, out_pad]."""
    hid_f, out_f = w2.shape
    out_pad = _round_up(out_f, 128)
    w2_p = jnp.pad(w2.astype(jnp.bfloat16),
                   ((0, hid_pad - hid_f), (0, out_pad - out_f)))
    b2_p = jnp.pad(b2.astype(jnp.float32), ((0, out_pad - out_f),)).reshape(1, out_pad)
    return (w2_p, b2_p, out_f)


def prepare_multitask_params(params):
    """Pre-cast (bf16) and pre-pad ALL weights once; reuse across forward calls."""
    w1, b1 = params["backbone"]
    backbone = prepare_backbone_params(w1, b1)
    hid_pad = backbone[0].shape[1]
    heads = {name: prepare_head_params(w2, b2, hid_pad)
             for name, (w2, b2) in params["task_heads"].items()}
    return {"backbone": backbone, "task_heads": heads}


# ------------------------------ fused forward ------------------------------

def fused_mlp_prepared(x, backbone, head, *, out_dtype=jnp.float32, tile_b=None,
                       force_hid_stream=False):
    """Fused Linear->GELU->Linear on pre-padded bf16 params. Returns [B, out_f].

    out_dtype: pass jnp.bfloat16 to halve output writeback if downstream allows it.
    """
    w1_p, b1_p = backbone
    w2_p, b2_p, out_f = head
    B, in_f = x.shape
    assert w1_p.shape[0] == in_f
    hid_pad = w1_p.shape[1]
    out_pad = w2_p.shape[1]
    out_bytes = jnp.dtype(out_dtype).itemsize

    ew_dtype = _elementwise_dtype()
    use_buffered = _buffered_one_supported()
    wbuf = 1 if use_buffered else 2
    wkw = {"pipeline_mode": pl.Buffered(1)} if use_buffered else {}
    cap = _vmem_cap_bytes()

    # Batch tiling: aim for >=2 grid steps (v7x megacore + pipelining), rows a
    # multiple of 16 (bf16 sublane pack), capped at 512 rows/step.
    if tile_b is None:
        tile_b = min(512, _round_up(max(_cdiv(B, 2), 8), 16))
    tile_b = max(16, _round_up(tile_b, 16))
    B_pad = _round_up(B, tile_b)

    x_p = x.astype(jnp.bfloat16)
    if B_pad != B:
        x_p = jnp.pad(x_p, ((0, B_pad - B), (0, 0)))

    flops = int(2 * B_pad * (in_f * hid_pad + hid_pad * out_pad))
    transc = int(B_pad * hid_pad)
    bytes_accessed = int(x_p.size * 2 + w1_p.size * 2 + w2_p.size * 2
                         + b1_p.size * 4 + b2_p.size * 4 + B_pad * out_pad * out_bytes)

    # Whole-weight-resident footprint (weights x wbuf, x/out tiles double-buffered,
    # plus f32 h / o temporaries).
    resident_bytes = (wbuf * (w1_p.size * 2 + w2_p.size * 2 + b1_p.size * 4 + b2_p.size * 4)
                      + 2 * tile_b * in_f * 2
                      + 2 * tile_b * out_pad * out_bytes
                      + tile_b * hid_pad * 4
                      + tile_b * out_pad * 4)
    use_resident = (not force_hid_stream) and int(resident_bytes * 1.25) <= cap

    out_shape = jax.ShapeDtypeStruct((B_pad, out_pad), out_dtype)

    if use_resident:
        vmem_limit = int(min(cap, max(resident_bytes * 1.3, 16 * 1024 * 1024)))
        out = pl.pallas_call(
            functools.partial(_mlp_resident_kernel, ew_dtype=ew_dtype),
            out_shape=out_shape,
            grid_spec=pltpu.PrefetchScalarGridSpec(
                num_scalar_prefetch=0,
                grid=(B_pad // tile_b,),
                in_specs=[
                    pl.BlockSpec((tile_b, in_f), lambda i: (i, 0)),           # x tile
                    pl.BlockSpec((in_f, hid_pad), lambda i: (0, 0), **wkw),   # W1 resident
                    pl.BlockSpec((1, hid_pad), lambda i: (0, 0), **wkw),      # b1 resident
                    pl.BlockSpec((hid_pad, out_pad), lambda i: (0, 0), **wkw),  # W2 resident
                    pl.BlockSpec((1, out_pad), lambda i: (0, 0), **wkw),      # b2 resident
                ],
                out_specs=pl.BlockSpec((tile_b, out_pad), lambda i: (i, 0)),
            ),
            compiler_params=pltpu.CompilerParams(
                dimension_semantics=("parallel",),
                vmem_limit_bytes=vmem_limit,
            ),
            cost_estimate=pl.CostEstimate(flops=flops, transcendentals=transc,
                                          bytes_accessed=bytes_accessed),
        )(x_p, w1_p, b1_p, w2_p, b2_p)
    else:
        # Hidden-dim streaming path (e.g. production-size weights on v7x's 64 MiB VMEM).
        tile_h = 128
        for cand in (2048, 1024, 512, 256, 128):
            if hid_pad % cand == 0:
                tile_h = cand
                break
        num_h = hid_pad // tile_h
        stream_bytes = (2 * (in_f * tile_h * 2 + tile_h * out_pad * 2 + tile_h * 4)
                        + wbuf * b2_p.size * 4
                        + 2 * tile_b * in_f * 2
                        + 2 * tile_b * out_pad * out_bytes
                        + tile_b * out_pad * 4        # f32 accumulator scratch
                        + tile_b * tile_h * 4)        # f32 h temporary
        vmem_limit = int(min(cap, max(stream_bytes * 1.3, 16 * 1024 * 1024)))
        out = pl.pallas_call(
            functools.partial(_mlp_hidstream_kernel, ew_dtype=ew_dtype),
            out_shape=out_shape,
            grid_spec=pltpu.PrefetchScalarGridSpec(
                num_scalar_prefetch=0,
                grid=(B_pad // tile_b, num_h),
                in_specs=[
                    pl.BlockSpec((tile_b, in_f), lambda i, k: (i, 0)),      # x tile
                    pl.BlockSpec((in_f, tile_h), lambda i, k: (0, k)),      # W1 col-block
                    pl.BlockSpec((1, tile_h), lambda i, k: (0, k)),         # b1 chunk
                    pl.BlockSpec((tile_h, out_pad), lambda i, k: (k, 0)),   # W2 row-block
                    pl.BlockSpec((1, out_pad), lambda i, k: (0, 0)),        # b2
                ],
                out_specs=pl.BlockSpec((tile_b, out_pad), lambda i, k: (i, 0)),
                scratch_shapes=[pltpu.VMEM((tile_b, out_pad), jnp.float32)],
            ),
            compiler_params=pltpu.CompilerParams(
                dimension_semantics=("parallel", "arbitrary"),
                vmem_limit_bytes=vmem_limit,
            ),
            cost_estimate=pl.CostEstimate(flops=flops, transcendentals=transc,
                                          bytes_accessed=bytes_accessed),
        )(x_p, w1_p, b1_p, w2_p, b2_p)

    # Strip batch / lane padding.
    return out[:B, :out_f]


def multitask_forward(x, prepared_params, task_id, **kw):
    """Mirrors MultiTaskModel.forward: x -> backbone -> task_heads[task_id]."""
    # TODO(synk): nn.ModuleDict string lookup has no in-kernel equivalent; it is
    # resolved host-side here and only the selected head is fed to the kernel.
    return fused_mlp_prepared(x, prepared_params["backbone"],
                              prepared_params["task_heads"][task_id], **kw)


# ------------------------------ reference / init ------------------------------

def init_linear_params(key, fan_in, fan_out, dtype=jnp.float32):
    """Deterministic init mimicking torch.nn.Linear defaults (kaiming-uniform)."""
    k_w, k_b = jax.random.split(key)
    bound = 1.0 / math.sqrt(fan_in)
    # Stored as [fan_in, fan_out] (transposed relative to PyTorch's [out, in]).
    w = jax.random.uniform(k_w, (fan_in, fan_out), dtype, -bound, bound)
    b = jax.random.uniform(k_b, (fan_out,), dtype, -bound, bound)
    return w, b


def mlp_reference(x, w1, b1, w2, b2):
    h = x @ w1 + b1
    h = jax.nn.gelu(h, approximate=False)   # torch.nn.GELU() default (erf)
    return h @ w2 + b2


if __name__ == "__main__":
    key = jax.random.PRNGKey(0)
    k_x, k_bb, k_ha, k_hb, k_bb2, k_h2 = jax.random.split(key, 6)

    # Small shapes consistent with the module: backbone Linear+GELU, two task heads.
    batch, in_features, hid_features, out_features = 16, 32, 64, 16

    x = jax.random.normal(k_x, (batch, in_features), jnp.float32)
    w1, b1 = init_linear_params(k_bb, in_features, hid_features)
    wa, ba = init_linear_params(k_ha, hid_features, out_features)
    wb, bb = init_linear_params(k_hb, hid_features, out_features)

    params = {"backbone": (w1, b1),
              "task_heads": {"task_a": (wa, ba), "task_b": (wb, bb)}}
    prepared = prepare_multitask_params(params)   # one-time bf16 cast + pad

    out_a = multitask_forward(x, prepared, "task_a")
    out_b = multitask_forward(x, prepared, "task_b")
    out_a, out_b = jax.block_until_ready((out_a, out_b))

    ref_a = mlp_reference(x, w1, b1, wa, ba)
    ref_b = mlp_reference(x, w1, b1, wb, bb)
    assert out_a.shape == (batch, out_features)
    assert out_b.shape == (batch, out_features)
    # bf16 MXU operands + tanh GELU -> close to, but not bit-exact with, torch f32/erf.
    assert jnp.allclose(out_a, ref_a, atol=2e-2, rtol=2e-2), "task_a mismatch vs reference"
    assert jnp.allclose(out_b, ref_b, atol=2e-2, rtol=2e-2), "task_b mismatch vs reference"

    # Also exercise the hidden-dim streaming path (used when weights exceed the
    # resident VMEM budget, e.g. large layers on v7x). hid=320 -> 3 hid chunks.
    hid2, out2 = 320, 24
    w1s, b1s = init_linear_params(k_bb2, in_features, hid2)
    w2s, b2s = init_linear_params(k_h2, hid2, out2)
    prepared_s = prepare_multitask_params(
        {"backbone": (w1s, b1s), "task_heads": {"head": (w2s, b2s)}})
    out_s = jax.block_until_ready(
        multitask_forward(x, prepared_s, "head", force_hid_stream=True))
    ref_s = mlp_reference(x, w1s, b1s, w2s, b2s)
    assert out_s.shape == (batch, out2)
    assert jnp.allclose(out_s, ref_s, atol=2e-2, rtol=2e-2), "streaming path mismatch"

    print("KERNEL_OK")
</pallas_src>

<mosaic_0001>
module attributes {stable_mosaic.version = 11 : i64} {
  func.func @_copy(%arg0: i32, %arg1: memref<8x128xf32, #tpu.memory_space<vmem>>, %arg2: memref<8x128xf32, #tpu.memory_space<vmem>>) attributes {dimension_semantics = [#tpu.dimension_semantics<arbitrary>], iteration_bounds = array<i64: 1>, scalar_prefetch = 0 : i64, scratch_operands = 0 : i64, tpu.core_type = #tpu.core_type<tc>, window_params = [{pipeline_mode = #tpu.pipeline_mode<synchronous>, transform_indices = @transform_0, window_bounds = array<i64: 8, 128>}, {pipeline_mode = #tpu.pipeline_mode<synchronous>, transform_indices = @transform_1, window_bounds = array<i64: 8, 128>}]} {
    %c0 = arith.constant 0 : index
    %c0_0 = arith.constant 0 : index
    %0 = vector.load %arg1[%c0, %c0_0] : memref<8x128xf32, #tpu.memory_space<vmem>>, vector<8x128xf32>
    %c0_1 = arith.constant 0 : index
    %c0_2 = arith.constant 0 : index
    %1 = vector.load %arg2[%c0_1, %c0_2] : memref<8x128xf32, #tpu.memory_space<vmem>>, vector<8x128xf32>
    tpu.vector_store %arg2[%c0_1, %c0_2], %0 {strides = array<i32>} : memref<8x128xf32, #tpu.memory_space<vmem>>, vector<8x128xf32>,
    return
  }
  func.func @transform_0(%arg0: i32) -> (i32, i32) {
    %c0_i32 = arith.constant 0 : i32
    %c0_i32_0 = arith.constant 0 : i32
    %c0_i32_1 = arith.constant 0 : i32
    return %c0_i32, %c0_i32_0 : i32, i32
  }
  func.func @transform_1(%arg0: i32) -> (i32, i32) {
    %c0_i32 = arith.constant 0 : i32
    %c0_i32_0 = arith.constant 0 : i32
    %c0_i32_1 = arith.constant 0 : i32
    return %c0_i32, %c0_i32_0 : i32, i32
  }
}

module attributes {stable_mosaic.version = 11 : i64} {
  func.func @_mlp_resident_kernel(%arg0: i32, %arg1: memref<16x32xbf16, #tpu.memory_space<vmem>>, %arg2: memref<32x128xbf16, #tpu.memory_space<vmem>>, %arg3: memref<1x128xf32, #tpu.memory_space<vmem>>, %arg4: memref<128x128xbf16, #tpu.memory_space<vmem>>, %arg5: memref<1x128xf32, #tpu.memory_space<vmem>>, %arg6: memref<16x128xf32, #tpu.memory_space<vmem>>) attributes {dimension_semantics = [#tpu.dimension_semantics<parallel>], iteration_bounds = array<i64: 1>, scalar_prefetch = 0 : i64, scratch_operands = 0 : i64, tpu.core_type = #tpu.core_type<tc>, window_params = [{transform_indices = @transform_0, window_bounds = array<i64: 16, 32>}, {pipeline_mode = #tpu.pipeline_mode<synchronous>, transform_indices = @transform_1, window_bounds = array<i64: 32, 128>}, {pipeline_mode = #tpu.pipeline_mode<synchronous>, transform_indices = @transform_2, window_bounds = array<i64: 1, 128>}, {pipeline_mode = #tpu.pipeline_mode<synchronous>, transform_indices = @transform_3, window_bounds = array<i64: 128, 128>}, {pipeline_mode = #tpu.pipeline_mode<synchronous>, transform_indices = @transform_4, window_bounds = array<i64: 1, 128>}, {transform_indices = @transform_5, window_bounds = array<i64: 16, 128>}]} {
    %c0 = arith.constant 0 : index
    %c0_0 = arith.constant 0 : index
    %0 = vector.load %arg1[%c0, %c0_0] : memref<16x32xbf16, #tpu.memory_space<vmem>>, vector<16x32xbf16>
    %c0_1 = arith.constant 0 : index
    %c0_2 = arith.constant 0 : index
    %1 = vector.load %arg2[%c0_1, %c0_2] : memref<32x128xbf16, #tpu.memory_space<vmem>>, vector<32x128xbf16>
    %cst = arith.constant dense<0.000000e+00> : vector<16x128xf32>
    %2 = tpu.matmul %0, %1, %cst {dimension_numbers = #tpu.dot_dimension_numbers<[1], [0], [0], [1], [0, 0, 1, 1], [], []>} : vector<16x32xbf16>, vector<32x128xbf16>, vector<16x128xf32> -> vector<16x128xf32>
    %c0_3 = arith.constant 0 : index
    %c0_4 = arith.constant 0 : index
    %3 = vector.load %arg3[%c0_3, %c0_4] : memref<1x128xf32, #tpu.memory_space<vmem>>, vector<1x128xf32>
    %4 = vector.broadcast %3 : vector<1x128xf32> to vector<16x128xf32>
    %5 = arith.addf %2, %4 : vector<16x128xf32>
    %6 = arith.mulf %5, %5 : vector<16x128xf32>
    %7 = arith.mulf %5, %6 : vector<16x128xf32>
    %cst_5 = arith.constant 4.471500e-02 : f32
    %8 = vector.broadcast %cst_5 : f32 to vector<16x128xf32>
    %9 = arith.mulf %8, %7 : vector<16x128xf32>
    %10 = arith.addf %5, %9 : vector<16x128xf32>
    %cst_6 = arith.constant 0.797884583 : f32
    %11 = vector.broadcast %cst_6 : f32 to vector<16x128xf32>
    %12 = arith.mulf %11, %10 : vector<16x128xf32>
    %13 = math.tanh %12 : vector<16x128xf32>
    %cst_7 = arith.constant 1.000000e+00 : f32
    %14 = vector.broadcast %cst_7 : f32 to vector<16x128xf32>
    %15 = arith.addf %14, %13 : vector<16x128xf32>
    %cst_8 = arith.constant 5.000000e-01 : f32
    %16 = vector.broadcast %cst_8 : f32 to vector<16x128xf32>
    %17 = arith.mulf %16, %15 : vector<16x128xf32>
    %18 = arith.mulf %5, %17 : vector<16x128xf32>
    %19 = arith.truncf %18 : vector<16x128xf32> to vector<16x128xbf16>
    %c0_9 = arith.constant 0 : index
    %c0_10 = arith.constant 0 : index
    %20 = vector.load %arg4[%c0_9, %c0_10] : memref<128x128xbf16, #tpu.memory_space<vmem>>, vector<128x128xbf16>
    %cst_11 = arith.constant dense<0.000000e+00> : vector<16x128xf32>
    %21 = tpu.matmul %19, %20, %cst_11 {dimension_numbers = #tpu.dot_dimension_numbers<[1], [0], [0], [1], [0, 0, 1, 1], [], []>} : vector<16x128xbf16>, vector<128x128xbf16>, vector<16x128xf32> -> vector<16x128xf32>
    %c0_12 = arith.constant 0 : index
    %c0_13 = arith.constant 0 : index
    %22 = vector.load %arg5[%c0_12, %c0_13] : memref<1x128xf32, #tpu.memory_space<vmem>>, vector<1x128xf32>
    %23 = vector.broadcast %22 : vector<1x128xf32> to vector<16x128xf32>
    %24 = arith.addf %21, %23 : vector<16x128xf32>
    %c0_14 = arith.constant 0 : index
    %c0_15 = arith.constant 0 : index
    %25 = vector.load %arg6[%c0_14, %c0_15] : memref<16x128xf32, #tpu.memory_space<vmem>>, vector<16x128xf32>
    tpu.vector_store %arg6[%c0_14, %c0_15], %24 {strides = array<i32>} : memref<16x128xf32, #tpu.memory_space<vmem>>, vector<16x128xf32>,
    return
  }
  func.func @transform_0(%arg0: i32) -> (i32, i32) {
    %c0_i32 = arith.constant 0 : i32
    %c0_i32_0 = arith.constant 0 : i32
    return %arg0, %c0_i32 : i32, i32
  }
  func.func @transform_1(%arg0: i32) -> (i32, i32) {
    %c0_i32 = arith.constant 0 : i32
    %c0_i32_0 = arith.constant 0 : i32
    %c0_i32_1 = arith.constant 0 : i32
    return %c0_i32, %c0_i32_0 : i32, i32
  }
  func.func @transform_2(%arg0: i32) -> (i32, i32) {
    %c0_i32 = arith.constant 0 : i32
    %c0_i32_0 = arith.constant 0 : i32
    %c0_i32_1 = arith.constant 0 : i32
    return %c0_i32, %c0_i32_0 : i32, i32
  }
  func.func @transform_3(%arg0: i32) -> (i32, i32) {
    %c0_i32 = arith.constant 0 : i32
    %c0_i32_0 = arith.constant 0 : i32
    %c0_i32_1 = arith.constant 0 : i32
    return %c0_i32, %c0_i32_0 : i32, i32
  }
  func.func @transform_4(%arg0: i32) -> (i32, i32) {
    %c0_i32 = arith.constant 0 : i32
    %c0_i32_0 = arith.constant 0 : i32
    %c0_i32_1 = arith.constant 0 : i32
    return %c0_i32, %c0_i32_0 : i32, i32
  }
  func.func @transform_5(%arg0: i32) -> (i32, i32) {
    %c0_i32 = arith.constant 0 : i32
    %c0_i32_0 = arith.constant 0 : i32
    return %arg0, %c0_i32 : i32, i32
  }
}

</mosaic_0001>

<llo_original>
// kernel: tpu_custom_call.1
$region0: #{tpu_custom_call.1}
  #allocation0 [shape = 'u32[]', space=smem, size = 0x4, offset = 0x4, fixed_abs, tag = 'smem constant byte address 0x4 - core index']
  #allocation1 [shape = 'u32[144,128]{1,0:T(1,128)}', space=vmem, size = 0x12000, scoped, tag = 'internal scratch']
  %s0 = inlined_call_operand.hbm [shape: f32[8,128], index: 0, kind: input, shape index: {}]
  %s1 = inlined_call_operand.hbm [shape: f32[8,128], index: 1, kind: output, shape index: {}]
  %s2 = sld [smem:[#allocation0]]
  $region18: #{tpu_custom_call.1} parent=0
    _
  %s4 = ssub.s32 1, %s2
  %s5 = scalar_select 0, %s4, %s2
  $region1: #{tpu_custom_call.1} parent=0
    #allocation2 [shape = 'u8[4096]{0}', space=vmem, size = 0x1000, scoped, tag = 'input window, operand 0, single buffered']
    #allocation3 [shape = 's32[1]{0}', space=sflag, size = 0x4, scoped, tag = 'scoped memory for tpu_custom_call.1']
    #allocation4 [shape = 's32[1]{0}', space=sflag, size = 0x4, scoped, tag = 'scoped memory for tpu_custom_call.1']
    #allocation5 [shape = 'u8[4096]{0}', space=vmem, size = 0x1000, scoped, tag = 'output window, operand 0, single buffered']
    %6 = vsyncpa [#allocation3], 0
    %7 = vsyncpa [#allocation4], 0
    // Predicated region
    $region2: #{tpu_custom_call.1} parent=1 // pred_check
      _
    $region3: #{tpu_custom_call.1} parent=1 // pred_check_branch
      %9 = sbr.rel (0) target = $region5
    $region4: #{tpu_custom_call.1} parent=1 // pred_region
      %s11 = ssub.s32 128, 128
      %12 = vsyncadd [#allocation3], %s11
      %s14 = sshll.u32 [#allocation2], 4
      %s15 = int_to_ptr.vmem [resolvable:$true] %s14
      %17 = dma.hbm_to_vmem [thread:$0]  %s0, 128, %s15, [#allocation3]
    $region5: #{tpu_custom_call.1} parent=1 // pred_fallthru
      _
    // Predicated region
    $region6: #{tpu_custom_call.1} parent=1 // pred_check
      _
    $region7: #{tpu_custom_call.1} parent=1 // pred_check_branch
      %19 = sbr.rel (0) target = $region9
    $region8: #{tpu_custom_call.1} parent=1 // pred_region
      %20 = dma.done [#allocation3], 128
    $region9: #{tpu_custom_call.1} parent=1 // pred_fallthru
      _
    %v21 = vld [vmem:[#allocation2] sm:$0xff]
    %22 = vst [vmem:[#allocation5] sm:$0xff] %v21
    // Predicated region
    $region10: #{tpu_custom_call.1} parent=1 // pred_check
      _
    $region11: #{tpu_custom_call.1} parent=1 // pred_check_branch
      %24 = sbr.rel (0) target = $region13
    $region12: #{tpu_custom_call.1} parent=1 // pred_region
      %s26 = ssub.s32 128, 128
      %27 = vsyncadd [#allocation4], %s26
      %s29 = sshll.u32 [#allocation5], 4
      %s30 = int_to_ptr.vmem [resolvable:$true] %s29
      %32 = dma.vmem_to_hbm [thread:$0]  %s30, 128, %s1, [#allocation4]
    $region13: #{tpu_custom_call.1} parent=1 // pred_fallthru
      _
    // Predicated region
    $region14: #{tpu_custom_call.1} parent=1 // pred_check
      _
    $region15: #{tpu_custom_call.1} parent=1 // pred_check_branch
      %34 = sbr.rel (0) target = $region17
    $region16: #{tpu_custom_call.1} parent=1 // pred_region
      %35 = dma.done [#allocation4], 128
    $region17: #{tpu_custom_call.1} parent=1 // pred_fallthru
      _
    %36 = vsyncpa [#allocation3], 1
    %37 = vsyncpa [#allocation4], 1

// kernel: tpu_custom_call.1
$region0: #{tpu_custom_call.1}
  #allocation0 [shape = 'u32[]', space=smem, size = 0x4, offset = 0x4, fixed_abs, tag = 'smem constant byte address 0x4 - core index']
  #allocation1 [shape = 'u32[144,128]{1,0:T(1,128)}', space=vmem, size = 0x12000, scoped, tag = 'internal scratch']
  %s0 = inlined_call_operand.hbm [shape: bf16[16,32], index: 0, kind: input, shape index: {}]
  %s1 = inlined_call_operand.hbm [shape: bf16[32,128], index: 1, kind: input, shape index: {}]
  %s2 = inlined_call_operand.vmem [shape: f32[1,128], index: 2, kind: input, shape index: {}]
  %s3 = inlined_call_operand.hbm [shape: bf16[128,128], index: 3, kind: input, shape index: {}]
  %s4 = inlined_call_operand.vmem [shape: f32[1,128], index: 4, kind: input, shape index: {}]
  %s5 = inlined_call_operand.hbm [shape: f32[16,128], index: 5, kind: output, shape index: {}]
  %s6 = sld [smem:[#allocation0]]
  $region42: #{tpu_custom_call.1} parent=0
    _
  %s8 = ssub.s32 1, %s6
  %s9 = scalar_select 0, %s8, %s6
  $region1: #{tpu_custom_call.1} parent=0
    #allocation2 [shape = 'u8[4096]{0}', space=vmem, size = 0x1000, scoped, tag = 'input window, operand 0, single buffered']
    #allocation3 [shape = 's32[1]{0}', space=sflag, size = 0x4, scoped, tag = 'scoped memory for tpu_custom_call.1']
    #allocation4 [shape = 's32[1]{0}', space=sflag, size = 0x4, scoped, tag = 'scoped memory for tpu_custom_call.1']
    #allocation5 [shape = 'u8[8192]{0}', space=vmem, size = 0x2000, scoped, tag = 'input window, operand 1, single buffered']
    #allocation6 [shape = 's32[1]{0}', space=sflag, size = 0x4, scoped, tag = 'scoped memory for tpu_custom_call.1']
    #allocation7 [shape = 'u8[32768]{0}', space=vmem, size = 0x8000, scoped, tag = 'input window, operand 3, single buffered']
    #allocation8 [shape = 'u8[8192]{0}', space=vmem, size = 0x2000, scoped, tag = 'output window, operand 0, single buffered']
    %10 = vsyncpa [#allocation3], 0
    %11 = vsyncpa [#allocation6], 0
    %12 = vsyncpa [#allocation4], 0
    // Predicated region
    $region2: #{tpu_custom_call.1} parent=1 // pred_check
      _
    $region3: #{tpu_custom_call.1} parent=1 // pred_check_branch
      %14 = sbr.rel (0) target = $region5
    $region4: #{tpu_custom_call.1} parent=1 // pred_region
      %s16 = ssub.s32 128, 128
      %17 = vsyncadd [#allocation3], %s16
      %s18 = sshll.u32 [#allocation2], 4
      %s19 = int_to_ptr.vmem [resolvable:$true] %s18
      %24 = dma.hbm_to_vmem [thread:$0]  %s0, 128, %s19, [#allocation3], 64, 64, 4
    $region5: #{tpu_custom_call.1} parent=1 // pred_fallthru
      _
    // Predicated region
    $region6: #{tpu_custom_call.1} parent=1 // pred_check
      _
    $region7: #{tpu_custom_call.1} parent=1 // pred_check_branch
      %26 = sbr.rel (0) target = $region9
    $region8: #{tpu_custom_call.1} parent=1 // pred_region
      %s28 = ssub.s32 256, 256
      %29 = vsyncadd [#allocation6], %s28
      %s30 = sshll.u32 [#allocation5], 4
      %s31 = int_to_ptr.vmem [resolvable:$true] %s30
      %36 = dma.hbm_to_vmem [thread:$0]  %s1, 256, %s31, [#allocation6], 64, 64, 4
    $region9: #{tpu_custom_call.1} parent=1 // pred_fallthru
      _
    // Predicated region
    $region10: #{tpu_custom_call.1} parent=1 // pred_check
      _
    $region11: #{tpu_custom_call.1} parent=1 // pred_check_branch
      %38 = sbr.rel (0) target = $region13
    $region12: #{tpu_custom_call.1} parent=1 // pred_region
      _
    $region13: #{tpu_custom_call.1} parent=1 // pred_fallthru
      _
    // Predicated region
    $region14: #{tpu_custom_call.1} parent=1 // pred_check
      _
    $region15: #{tpu_custom_call.1} parent=1 // pred_check_branch
      %40 = sbr.rel (0) target = $region17
    $region16: #{tpu_custom_call.1} parent=1 // pred_region
      %s42 = ssub.s32 1024, 1024
      %43 = vsyncadd [#allocation6], %s42
      %s44 = sshll.u32 [#allocation7], 4
      %s45 = int_to_ptr.vmem [resolvable:$true] %s44
      %50 = dma.hbm_to_vmem [thread:$0]  %s3, 1024, %s45, [#allocation6], 64, 64, 4
    $region17: #{tpu_custom_call.1} parent=1 // pred_fallthru
      _
    // Predicated region
    $region18: #{tpu_custom_call.1} parent=1 // pred_check
      _
    $region19: #{tpu_custom_call.1} parent=1 // pred_check_branch
      %52 = sbr.rel (0) target = $region21
    $region20: #{tpu_custom_call.1} parent=1 // pred_region
      _
    $region21: #{tpu_custom_call.1} parent=1 // pred_fallthru
      _
    // Predicated region
    $region22: #{tpu_custom_call.1} parent=1 // pred_check
      _
    $region23: #{tpu_custom_call.1} parent=1 // pred_check_branch
      %54 = sbr.rel (0) target = $region25
    $region24: #{tpu_custom_call.1} parent=1 // pred_region
      %55 = dma.done [#allocation3], 128
    $region25: #{tpu_custom_call.1} parent=1 // pred_fallthru
      _
    // Predicated region
    $region26: #{tpu_custom_call.1} parent=1 // pred_check
      _
    $region27: #{tpu_custom_call.1} parent=1 // pred_check_branch
      %57 = sbr.rel (0) target = $region29
    $region28: #{tpu_custom_call.1} parent=1 // pred_region
      %58 = dma.done [#allocation6], 256
    $region29: #{tpu_custom_call.1} parent=1 // pred_fallthru
      _
    // Predicated region
    $region30: #{tpu_custom_call.1} parent=1 // pred_check
      _
    $region31: #{tpu_custom_call.1} parent=1 // pred_check_branch
      %60 = sbr.rel (0) target = $region33
    $region32: #{tpu_custom_call.1} parent=1 // pred_region
      %61 = dma.done [#allocation6], 1024
    $region33: #{tpu_custom_call.1} parent=1 // pred_fallthru
      _
    %v63 = vld [vmem:[#allocation2] sm:$0xf]
    %v64 = vld [vmem:[#allocation2 + $0x4] sm:$0xf]
    %v65 = vld [vmem:[#allocation5] sm:$0xf]
    %v66 = vld [vmem:[#allocation5 + $0x4] sm:$0xf]
    %v67 = vld [vmem:[#allocation5 + $0x8] sm:$0xf]
    %v68 = vld [vmem:[#allocation5 + $0xc] sm:$0xf]
    %v69 = vld [vmem:[%s2] sm:$0x1]
    %v71 = vlaneseq
    %v72 = vshrl.u32 %v71, 7
    %v73 = vsub.s32 0, %v72
    %v74 = vrot.slane %v69, %v73
    %v78 = vunpack.c.l.b16 %v63
    %v79 = vunpack.c.l.b16 %v64
    %v80 = vpack.c.b16 %v79, %v78
    %v85 = vunpack.c.l.b16 %v65
    %v86 = vunpack.c.l.b16 %v66
    %v87 = vunpack.c.l.b16 %v67
    %v88 = vunpack.c.l.b16 %v68
    %v89 = vpack.c.b16 %v86, %v85
    %v90 = vpack.c.b16 %v88, %v87
    %vm93 = vcmask 261120
    %v95 = vsel %vm93, %v80, 0
    %97 = vmatprep.subr.bf16.mxu0 0
    %98 = vmatpush1.bf16.msra.mxu0 %v89
    %99 = vmatprep.subr.bf16.mxu0 0
    %100 = vmatpush1.bf16.msra.mxu0 %v90
    %101 = vmatprep.subr.bf16.mxu0 0
    %102 = vmatpush1.bf16.msra.mxu0 0
    %103 = vmatprep.subr.bf16.mxu0 0
    %104 = vmatpush1.bf16.msra.mxu0 0
    %105 = vmatprep.subr.bf16.mxu0 0
    %106 = vmatpush1.bf16.msra.mxu0 0
    %107 = vmatprep.subr.bf16.mxu0 0
    %108 = vmatpush1.bf16.msra.mxu0 0
    %109 = vmatprep.subr.bf16.mxu0 0
    %110 = vmatpush1.bf16.msra.mxu0 0
    %111 = vmatprep.subr.bf16.mxu0 0
    %112 = vmatpush1.bf16.msra.mxu0 0
    %113 = vmatprep.subr.bf16.mxu0 0
    %114 = vmatpush1.bf16.msra.mxu0 0
    %115 = vmatprep.subr.bf16.mxu0 0
    %116 = vmatpush1.bf16.msra.mxu0 0
    %117 = vmatprep.subr.bf16.mxu0 0
    %118 = vmatpush1.bf16.msra.mxu0 0
    %119 = vmatprep.subr.bf16.mxu0 0
    %120 = vmatpush1.bf16.msra.mxu0 0
    %121 = vmatprep.subr.bf16.mxu0 0
    %122 = vmatpush1.bf16.msra.mxu0 0
    %123 = vmatprep.subr.bf16.mxu0 0
    %124 = vmatpush1.bf16.msra.mxu0 0
    %125 = vmatprep.subr.bf16.mxu0 0
    %126 = vmatpush1.bf16.msra.mxu0 0
    %127 = vmatprep.subr.bf16.mxu0 0
    %128 = vmatpush1.bf16.msra.mxu0 0
    %129 = vmatprep.mubr.bf16.mxu0 0
    %130 = vmatmul.mubr.bf16.gmra.mrb[0].mxu0 %v95
    %v131 = vpop.f32.mrb[0].mxu0
    %v132 = vadd.f32 %v74, %v131
    %v133 = vpop.f32.mrb[0].mxu0
    %v134 = vpop.f32.mrb[0].mxu0
    %v135 = vadd.f32 %v74, %v134
    %v136 = vpop.f32.mrb[0].mxu0
    %137 = vdwg.mxu0
    %v138 = vmul.f32 %v132, %v132
    %v139 = vmul.f32 %v135, %v135
    %v140 = vmul.f32 %v132, %v138
    %v141 = vmul.f32 %v135, %v139
    %v142 = vmul.f32 %v140, 0.044715
    %v143 = vmul.f32 %v141, 0.044715
    %v144 = vadd.f32 %v132, %v142
    %v145 = vadd.f32 %v135, %v143
    %v146 = vmul.f32 %v144, 0.7978846
    %v147 = vmul.f32 %v145, 0.7978846
    %v148 = vtanh.pop %v146
    %v149 = vtanh.pop %v147
    %v150 = vadd.f32 %v148, 1.0
    %v151 = vadd.f32 %v149, 1.0
    %v152 = vmul.f32 %v150, 0.5
    %v153 = vmul.f32 %v151, 0.5
    %v154 = vmul.f32 %v132, %v152
    %v155 = vmul.f32 %v135, %v153
    %v156 = vpack.c.bf16 %v155, %v154
    %v157 = vld [vmem:[#allocation7] sm:$0xf]
    %v158 = vld [vmem:[#allocation7 + $0x4] sm:$0xf]
    %v159 = vld [vmem:[#allocation7 + $0x8] sm:$0xf]
    %v160 = vld [vmem:[#allocation7 + $0xc] sm:$0xf]
    %v161 = vld [vmem:[#allocation7 + $0x10] sm:$0xf]
    %v162 = vld [vmem:[#allocation7 + $0x14] sm:$0xf]
    %v163 = vld [vmem:[#allocation7 + $0x18] sm:$0xf]
    %v164 = vld [vmem:[#allocation7 + $0x1c] sm:$0xf]
    %v165 = vld [vmem:[#allocation7 + $0x20] sm:$0xf]
    %v166 = vld [vmem:[#allocation7 + $0x24] sm:$0xf]
    %v167 = vld [vmem:[#allocation7 + $0x28] sm:$0xf]
    %v168 = vld [vmem:[#allocation7 + $0x2c] sm:$0xf]
    %v169 = vld [vmem:[#allocation7 + $0x30] sm:$0xf]
    %v170 = vld [vmem:[#allocation7 + $0x34] sm:$0xf]
    %v171 = vld [vmem:[#allocation7 + $0x38] sm:$0xf]
    %v172 = vld [vmem:[#allocation7 + $0x3c] sm:$0xf]
    %v173 = vld [vmem:[%s4] sm:$0x1]
    %v175 = vlaneseq
    %v176 = vshrl.u32 %v175, 7
    %v177 = vsub.s32 0, %v176
    %v178 = vrot.slane %v173, %v177
    %v196 = vunpack.c.l.b16 %v157
    %v197 = vunpack.c.l.b16 %v158
    %v198 = vunpack.c.l.b16 %v159
    %v199 = vunpack.c.l.b16 %v160
    %v200 = vunpack.c.l.b16 %v161
    %v201 = vunpack.c.l.b16 %v162
    %v202 = vunpack.c.l.b16 %v163
    %v203 = vunpack.c.l.b16 %v164
    %v204 = vunpack.c.l.b16 %v165
    %v205 = vunpack.c.l.b16 %v166
    %v206 = vunpack.c.l.b16 %v167
    %v207 = vunpack.c.l.b16 %v168
    %v208 = vunpack.c.l.b16 %v169
    %v209 = vunpack.c.l.b16 %v170
    %v210 = vunpack.c.l.b16 %v171
    %v211 = vunpack.c.l.b16 %v172
    %v212 = vpack.c.b16 %v197, %v196
    %v213 = vpack.c.b16 %v199, %v198
    %v214 = vpack.c.b16 %v201, %v200
    %v215 = vpack.c.b16 %v203, %v202
    %v216 = vpack.c.b16 %v205, %v204
    %v217 = vpack.c.b16 %v207, %v206
    %v218 = vpack.c.b16 %v209, %v208
    %v219 = vpack.c.b16 %v211, %v210
    %228 = vmatprep.subr.bf16.mxu0 0
    %229 = vmatpush1.bf16.msra.mxu0 %v212
    %230 = vmatprep.subr.bf16.mxu0 0
    %231 = vmatpush1.bf16.msra.mxu0 %v213
    %232 = vmatprep.subr.bf16.mxu0 0
    %233 = vmatpush1.bf16.msra.mxu0 %v214
    %234 = vmatprep.subr.bf16.mxu0 0
    %235 = vmatpush1.bf16.msra.mxu0 %v215
    %236 = vmatprep.subr.bf16.mxu0 0
    %237 = vmatpush1.bf16.msra.mxu0 %v216
    %238 = vmatprep.subr.bf16.mxu0 0
    %239 = vmatpush1.bf16.msra.mxu0 %v217
    %240 = vmatprep.subr.bf16.mxu0 0
    %241 = vmatpush1.bf16.msra.mxu0 %v218
    %242 = vmatprep.subr.bf16.mxu0 0
    %243 = vmatpush1.bf16.msra.mxu0 %v219
    %244 = vmatprep.subr.bf16.mxu0 0
    %245 = vmatpush1.bf16.msra.mxu0 0
    %246 = vmatprep.subr.bf16.mxu0 0
    %247 = vmatpush1.bf16.msra.mxu0 0
    %248 = vmatprep.subr.bf16.mxu0 0
    %249 = vmatpush1.bf16.msra.mxu0 0
    %250 = vmatprep.subr.bf16.mxu0 0
    %251 = vmatpush1.bf16.msra.mxu0 0
    %252 = vmatprep.subr.bf16.mxu0 0
    %253 = vmatpush1.bf16.msra.mxu0 0
    %254 = vmatprep.subr.bf16.mxu0 0
    %255 = vmatpush1.bf16.msra.mxu0 0
    %256 = vmatprep.subr.bf16.mxu0 0
    %257 = vmatpush1.bf16.msra.mxu0 0
    %258 = vmatprep.subr.bf16.mxu0 0
    %259 = vmatpush1.bf16.msra.mxu0 0
    %260 = vmatprep.mubr.bf16.mxu0 0
    %261 = vmatmul.mubr.bf16.gmra.mrb[0].mxu0 %v156
    %v262 = vpop.f32.mrb[0].mxu0
    %v263 = vadd.f32 %v178, %v262
    %v264 = vpop.f32.mrb[0].mxu0
    %v265 = vpop.f32.mrb[0].mxu0
    %v266 = vadd.f32 %v178, %v265
    %v267 = vpop.f32.mrb[0].mxu0
    %268 = vdwg.mxu0
    %269 = vst [vmem:[#allocation8] sm:$0xff] %v263
    %270 = vst [vmem:[#allocation8 + $0x8] sm:$0xff] %v266
    // Predicated region
    $region34: #{tpu_custom_call.1} parent=1 // pred_check
      _
    $region35: #{tpu_custom_call.1} parent=1 // pred_check_branch
      %272 = sbr.rel (0) target = $region37
    $region36: #{tpu_custom_call.1} parent=1 // pred_region
      %s274 = ssub.s32 256, 256
      %275 = vsyncadd [#allocation4], %s274
      %s276 = sshll.u32 [#allocation8], 4
      %s277 = int_to_ptr.vmem [resolvable:$true] %s276
      %282 = dma.vmem_to_hbm [thread:$0]  %s277, 256, %s5, [#allocation4], 128, 128, 8
    $region37: #{tpu_custom_call.1} parent=1 // pred_fallthru
      _
    // Predicated region
    $region38: #{tpu_custom_call.1} parent=1 // pred_check
      _
    $region39: #{tpu_custom_call.1} parent=1 // pred_check_branch
      %284 = sbr.rel (0) target = $region41
    $region40: #{tpu_custom_call.1} parent=1 // pred_region
      %285 = dma.done [#allocation4], 256
    $region41: #{tpu_custom_call.1} parent=1 // pred_fallthru
      _
    %286 = vsyncpa [#allocation3], 1
    %287 = vsyncpa [#allocation6], 1
    %288 = vsyncpa [#allocation4], 1

</llo_original>
